<compile_context>
chip_gen: v6e
topology: v6e:2x2x1
jax: 0.10.0
libtpu: 0.0.40
codegen_flags: <defaults>
</compile_context>

<pallas_src>
import jax
import jax.numpy as jnp
import numpy as np
from jax.experimental import pallas as pl
from jax.experimental.pallas import tpu as pltpu


# ----------------------------- kernels ------------------------------------ #

def _ctg_kernel_single(x_ref, m_ref, b_ref, o_ref):
    # Single contraction step (weight-resident or ck == civ): no accumulator,
    # result goes straight from the MXU to the output tile.
    #   x_ref: (ROWS, CK)   m_ref: (CK, COV)   b_ref: (1, COV) f32
    #   o_ref: (ROWS, COV)
    o_ref[...] = (
        jnp.dot(x_ref[...], m_ref[...], preferred_element_type=jnp.float32)
        + b_ref[...]
    ).astype(o_ref.dtype)


def _ctg_kernel_stream(x_ref, m_ref, b_ref, o_ref, acc_ref):
    # K-streaming variant: f32 VMEM accumulator resident across the
    # contraction grid axis; bias folded in once on the last step.
    kk = pl.program_id(1)

    @pl.when(kk == 0)
    def _():
        acc_ref[...] = jnp.zeros_like(acc_ref)

    acc_ref[...] += jnp.dot(x_ref[...], m_ref[...],
                            preferred_element_type=jnp.float32)

    @pl.when(kk == pl.num_programs(1) - 1)
    def _():
        o_ref[...] = (acc_ref[...] + b_ref[...]).astype(o_ref.dtype)


# ----------------------------- helpers ------------------------------------ #

def _round_up(x, m):
    return ((x + m - 1) // m) * m


def _vmem_capacity_bytes():
    """Per-TensorCore VMEM capacity; conservative fallback if unqueryable."""
    try:
        return int(pltpu.get_tpu_info().vmem_capacity_bytes)
    except Exception:
        return 64 << 20  # v7x per-TC VMEM (smallest current generation)


def _pick_row_tile(rows, rt_cap):
    """Largest row tile (mult of 8) <= rt_cap with <=12.5% padding waste."""
    rt_cap = max(8, (rt_cap // 8) * 8)
    rows8 = _round_up(rows, 8)
    if rows8 <= rt_cap:
        return rows8  # one tile covers everything (pad only to mult of 8)
    for rt in (1024, 768, 512, 384, 256, 192, 128, 96, 64, 32, 16, 8):
        if rt <= rt_cap and (_round_up(rows, rt) - rows) * 8 <= rows:
            return rt
    return 8


def make_fused_params(weight, bias, adj, kernel_size, compute_dtype):
    """Fuse the 1x1-conv weight/bias with the adjacency (lane-padded to 128).

    Depends only on (weight, bias, adj); hoist/cache this out of the
    per-forward path in real training/inference loops.
    """
    kc, c_in = weight.shape
    c_out = kc // kernel_size
    _, v, _ = adj.shape
    civ, cov = c_in * v, c_out * v
    civ_p, cov_p = _round_up(civ, 128), _round_up(cov, 128)

    w3 = weight.reshape(kernel_size, c_out, c_in).astype(jnp.float32)
    adj32 = adj.astype(jnp.float32)
    fused_w = jnp.einsum("kci,kvw->ivcw", w3, adj32).reshape(civ, cov)
    if bias is None:
        fused_b = jnp.zeros((1, cov), jnp.float32)
    else:
        fused_b = jnp.einsum(
            "kc,kvw->cw",
            bias.reshape(kernel_size, c_out).astype(jnp.float32),
            adj32).reshape(1, cov)

    fused_w = jnp.pad(fused_w, ((0, civ_p - civ), (0, cov_p - cov)))
    fused_b = jnp.pad(fused_b, ((0, 0), (0, cov_p - cov)))
    return fused_w.astype(compute_dtype), fused_b


# ----------------------------- wrapper ------------------------------------ #

def conv_temporal_graphical(x, weight, bias, adj, *, kernel_size,
                            compute_dtype=jnp.bfloat16,
                            row_tile=None, weight_resident=None,
                            contraction_tile=None, vmem_cap_bytes=None):
    """Pallas implementation of ConvTemporalGraphical.forward
    (t_kernel_size=1, t_stride=1).  Returns (out, adj) like the PyTorch module.
    """
    n, c_in, t, v = x.shape
    kc = weight.shape[0]
    assert kc % kernel_size == 0
    c_out = kc // kernel_size
    assert adj.shape == (kernel_size, v, v)

    civ, cov = c_in * v, c_out * v
    civ_p, cov_p = _round_up(civ, 128), _round_up(cov, 128)

    fused_w, fused_b = make_fused_params(weight, bias, adj, kernel_size,
                                         compute_dtype)

    in_isz = jnp.dtype(compute_dtype).itemsize
    out_dtype = x.dtype
    out_isz = jnp.dtype(out_dtype).itemsize

    # ---- lane-dense flattened rows: (N*T, C_in*V), zero-padded lanes ----
    rows = n * t
    x_rows = jnp.transpose(x, (0, 2, 1, 3)).reshape(rows, civ).astype(compute_dtype)
    if civ_p != civ:
        x_rows = jnp.pad(x_rows, ((0, 0), (0, civ_p - civ)))

    # ---- generation-aware VMEM budgeting ----
    if vmem_cap_bytes is None:
        vmem_cap_bytes = _vmem_capacity_bytes()
    vmem_limit = int(vmem_cap_bytes * 0.8)
    alloc_budget = int(vmem_limit * 0.9)

    w_bytes = civ_p * cov_p * in_isz
    if weight_resident is None:
        # Conservative: assume the constant-index fused_w block is still
        # double-buffered by the pipeliner when checking the fit.
        weight_resident = (2 * w_bytes
                           + 2 * 8 * civ_p * in_isz     # minimal x tile
                           + 2 * 8 * cov_p * out_isz    # minimal out tile
                           ) <= alloc_budget

    if weight_resident and contraction_tile is None:
        ck, num_k = civ_p, 1
        per_row = 2 * civ_p * in_isz + 2 * cov_p * out_isz
        rt_cap = (alloc_budget - 2 * w_bytes) // max(1, per_row)
    else:
        if contraction_tile is not None:
            ck = int(contraction_tile)
            assert ck % 128 == 0 and civ_p % ck == 0
        else:
            m_budget = alloc_budget // 3
            ck, d = 128, 128
            while d <= civ_p:
                if civ_p % d == 0 and 2 * d * cov_p * in_isz <= m_budget:
                    ck = d
                d += 128
        num_k = civ_p // ck
        per_row = (2 * ck * in_isz + 2 * cov_p * out_isz
                   + (cov_p * 4 if num_k > 1 else 0))
        rt_cap = (alloc_budget - 2 * ck * cov_p * in_isz) // max(1, per_row)

    if row_tile is None:
        row_tile = _pick_row_tile(rows, min(max(rt_cap, 8), 1024))
    row_tile = max(8, (row_tile // 8) * 8)

    rows_p = _round_up(rows, row_tile)
    if rows_p != rows:
        x_rows = jnp.pad(x_rows, ((0, rows_p - rows), (0, 0)))

    out_shape = jax.ShapeDtypeStruct((rows_p, cov_p), out_dtype)
    cparams = pltpu.CompilerParams(
        dimension_semantics=("parallel",) if num_k == 1
        else ("parallel", "arbitrary"),
        vmem_limit_bytes=int(vmem_limit),
    )

    if num_k == 1:
        # Weight-resident / single-step: constant index map on fused_w (fetched
        # once per core), no accumulator scratch.
        out_rows = pl.pallas_call(
            _ctg_kernel_single,
            out_shape=out_shape,
            grid_spec=pltpu.PrefetchScalarGridSpec(
                num_scalar_prefetch=0,
                grid=(rows_p // row_tile,),
                in_specs=[
                    pl.BlockSpec((row_tile, civ_p), lambda i: (i, 0)),
                    pl.BlockSpec((civ_p, cov_p), lambda i: (0, 0)),
                    pl.BlockSpec((1, cov_p), lambda i: (0, 0)),
                ],
                out_specs=pl.BlockSpec((row_tile, cov_p), lambda i: (i, 0)),
            ),
            compiler_params=cparams,
        )(x_rows, fused_w, fused_b)
    else:
        # K-streaming: contraction axis last ("arbitrary"), f32 accumulator.
        out_rows = pl.pallas_call(
            _ctg_kernel_stream,
            out_shape=out_shape,
            grid_spec=pltpu.PrefetchScalarGridSpec(
                num_scalar_prefetch=0,
                grid=(rows_p // row_tile, num_k),
                in_specs=[
                    pl.BlockSpec((row_tile, ck), lambda i, k: (i, k)),
                    pl.BlockSpec((ck, cov_p), lambda i, k: (k, 0)),
                    pl.BlockSpec((1, cov_p), lambda i, k: (0, 0)),
                ],
                out_specs=pl.BlockSpec((row_tile, cov_p), lambda i, k: (i, 0)),
                scratch_shapes=[pltpu.VMEM((row_tile, cov_p), jnp.float32)],
            ),
            compiler_params=cparams,
        )(x_rows, fused_w, fused_b)

    # TODO(synk): if the downstream op can consume the lane-dense (N, T, C_out*V)
    # layout, skip this slice/reshape/transpose (it is a pure XLA relayout pass).
    out = out_rows[:rows, :cov].reshape(n, t, c_out, v).transpose(0, 2, 1, 3)
    return out, adj


# ----------------------------- reference ---------------------------------- #

def _reference(x, weight, bias, adj, kernel_size):
    n, c_in, t, v = x.shape
    kc = weight.shape[0]
    c_out = kc // kernel_size
    y = jnp.einsum("oc,nctv->notv", weight, x) + bias[None, :, None, None]
    y = y.reshape(n, kernel_size, c_out, t, v)
    return jnp.einsum("nkctv,kvw->nctw", y, adj)


# ----------------------------- test --------------------------------------- #

if __name__ == "__main__":
    key = jax.random.PRNGKey(0)

    # ---- case 1: weight-resident path (civ 64->128, cov 128) ----
    N, C_IN, T, V, K, C_OUT = 2, 4, 16, 16, 3, 8
    k1, k2, k3, k4, key = jax.random.split(key, 5)
    x = jax.random.normal(k1, (N, C_IN, T, V), dtype=jnp.float32)
    weight = jax.random.normal(k2, (K * C_OUT, C_IN), dtype=jnp.float32) * 0.1
    bias = jax.random.normal(k3, (K * C_OUT,), dtype=jnp.float32) * 0.1
    adj = jax.random.normal(k4, (K, V, V), dtype=jnp.float32) * 0.1

    ref = _reference(x, weight, bias, adj, K)

    # f32 MXU path (tight check)
    out, adj_out = conv_temporal_graphical(x, weight, bias, adj, kernel_size=K,
                                           compute_dtype=jnp.float32)
    out = jax.block_until_ready(out)
    assert out.shape == (N, C_OUT, T, V)
    assert np.allclose(np.asarray(out), np.asarray(ref), rtol=1e-4, atol=1e-4)

    # default bf16 MXU inputs with f32 accumulation (loose check)
    out_bf, _ = conv_temporal_graphical(x, weight, bias, adj, kernel_size=K)
    out_bf = jax.block_until_ready(out_bf)
    assert np.allclose(np.asarray(out_bf), np.asarray(ref), rtol=5e-2, atol=5e-2)

    # ---- case 2: forced K-streaming path (civ 144->256 => 2 k-steps) ----
    N2, C2_IN, T2, V2, K2, C2_OUT = 2, 6, 20, 24, 3, 8
    j1, j2, j3, j4, key = jax.random.split(key, 5)
    x2 = jax.random.normal(j1, (N2, C2_IN, T2, V2), dtype=jnp.float32)
    w2 = jax.random.normal(j2, (K2 * C2_OUT, C2_IN), dtype=jnp.float32) * 0.1
    b2 = jax.random.normal(j3, (K2 * C2_OUT,), dtype=jnp.float32) * 0.1
    a2 = jax.random.normal(j4, (K2, V2, V2), dtype=jnp.float32) * 0.1

    ref2 = _reference(x2, w2, b2, a2, K2)
    out2, _ = conv_temporal_graphical(x2, w2, b2, a2, kernel_size=K2,
                                      compute_dtype=jnp.float32,
                                      weight_resident=False,
                                      contraction_tile=128)
    out2 = jax.block_until_ready(out2)
    assert out2.shape == (N2, C2_OUT, T2, V2)
    assert np.allclose(np.asarray(out2), np.asarray(ref2), rtol=1e-4, atol=1e-4)

    print("KERNEL_OK")
</pallas_src>

<mosaic_0001>
module attributes {stable_mosaic.version = 11 : i64} {
  func.func @_ctg_kernel_single(%arg0: i32, %arg1: memref<32x128xf32, #tpu.memory_space<vmem>>, %arg2: memref<128x128xf32, #tpu.memory_space<vmem>>, %arg3: memref<1x128xf32, #tpu.memory_space<vmem>>, %arg4: memref<32x128xf32, #tpu.memory_space<vmem>>) attributes {dimension_semantics = [#tpu.dimension_semantics<parallel>], iteration_bounds = array<i64: 1>, scalar_prefetch = 0 : i64, scratch_operands = 0 : i64, tpu.core_type = #tpu.core_type<tc>, window_params = [{transform_indices = @transform_0, window_bounds = array<i64: 32, 128>}, {pipeline_mode = #tpu.pipeline_mode<synchronous>, transform_indices = @transform_1, window_bounds = array<i64: 128, 128>}, {pipeline_mode = #tpu.pipeline_mode<synchronous>, transform_indices = @transform_2, window_bounds = array<i64: 1, 128>}, {transform_indices = @transform_3, window_bounds = array<i64: 32, 128>}]} {
    %c0 = arith.constant 0 : index
    %c0_0 = arith.constant 0 : index
    %0 = vector.load %arg1[%c0, %c0_0] : memref<32x128xf32, #tpu.memory_space<vmem>>, vector<32x128xf32>
    %c0_1 = arith.constant 0 : index
    %c0_2 = arith.constant 0 : index
    %1 = vector.load %arg2[%c0_1, %c0_2] : memref<128x128xf32, #tpu.memory_space<vmem>>, vector<128x128xf32>
    %cst = arith.constant dense<0.000000e+00> : vector<32x128xf32>
    %2 = tpu.matmul %0, %1, %cst {dimension_numbers = #tpu.dot_dimension_numbers<[1], [0], [0], [1], [0, 0, 1, 1], [], []>} : vector<32x128xf32>, vector<128x128xf32>, vector<32x128xf32> -> vector<32x128xf32>
    %c0_3 = arith.constant 0 : index
    %c0_4 = arith.constant 0 : index
    %3 = vector.load %arg3[%c0_3, %c0_4] : memref<1x128xf32, #tpu.memory_space<vmem>>, vector<1x128xf32>
    %4 = vector.broadcast %3 : vector<1x128xf32> to vector<32x128xf32>
    %5 = arith.addf %2, %4 : vector<32x128xf32>
    %c0_5 = arith.constant 0 : index
    %c0_6 = arith.constant 0 : index
    %6 = vector.load %arg4[%c0_5, %c0_6] : memref<32x128xf32, #tpu.memory_space<vmem>>, vector<32x128xf32>
    tpu.vector_store %arg4[%c0_5, %c0_6], %5 {strides = array<i32>} : memref<32x128xf32, #tpu.memory_space<vmem>>, vector<32x128xf32>,
    return
  }
  func.func @transform_0(%arg0: i32) -> (i32, i32) {
    %c0_i32 = arith.constant 0 : i32
    %c0_i32_0 = arith.constant 0 : i32
    return %arg0, %c0_i32 : i32, i32
  }
  func.func @transform_1(%arg0: i32) -> (i32, i32) {
    %c0_i32 = arith.constant 0 : i32
    %c0_i32_0 = arith.constant 0 : i32
    %c0_i32_1 = arith.constant 0 : i32
    return %c0_i32, %c0_i32_0 : i32, i32
  }
  func.func @transform_2(%arg0: i32) -> (i32, i32) {
    %c0_i32 = arith.constant 0 : i32
    %c0_i32_0 = arith.constant 0 : i32
    %c0_i32_1 = arith.constant 0 : i32
    return %c0_i32, %c0_i32_0 : i32, i32
  }
  func.func @transform_3(%arg0: i32) -> (i32, i32) {
    %c0_i32 = arith.constant 0 : i32
    %c0_i32_0 = arith.constant 0 : i32
    return %arg0, %c0_i32 : i32, i32
  }
}

</mosaic_0001>

<llo_original>
// kernel: tpu_custom_call.1
$region0: #{tpu_custom_call.1}
  #allocation0 [shape = 'u32[]', space=smem, size = 0x4, offset = 0x4, fixed_abs, tag = 'smem constant byte address 0x4 - core index']
  #allocation1 [shape = 'u32[144,128]{1,0:T(1,128)}', space=vmem, size = 0x12000, scoped, tag = 'internal scratch']
  %s0 = inlined_call_operand.hbm [shape: f32[32,128], index: 0, kind: input, shape index: {}]
  %s1 = inlined_call_operand.hbm [shape: f32[128,128], index: 1, kind: input, shape index: {}]
  %s2 = inlined_call_operand.vmem [shape: f32[1,128], index: 2, kind: input, shape index: {}]
  %s3 = inlined_call_operand.hbm [shape: f32[32,128], index: 3, kind: output, shape index: {}]
  %s4 = sld [smem:[#allocation0]]
  $region30: #{tpu_custom_call.1} parent=0
    _
  %s6 = ssub.s32 1, %s4
  %s7 = scalar_select 0, %s6, %s4
  $region1: #{tpu_custom_call.1} parent=0
    #allocation2 [shape = 'u8[16384]{0}', space=vmem, size = 0x4000, scoped, tag = 'input window, operand 0, single buffered']
    #allocation3 [shape = 's32[1]{0}', space=sflag, size = 0x4, scoped, tag = 'scoped memory for tpu_custom_call.1']
    #allocation4 [shape = 's32[1]{0}', space=sflag, size = 0x4, scoped, tag = 'scoped memory for tpu_custom_call.1']
    #allocation5 [shape = 'u8[65536]{0}', space=vmem, size = 0x10000, scoped, tag = 'input window, operand 1, single buffered']
    #allocation6 [shape = 's32[1]{0}', space=sflag, size = 0x4, scoped, tag = 'scoped memory for tpu_custom_call.1']
    #allocation7 [shape = 'u8[16384]{0}', space=vmem, size = 0x4000, scoped, tag = 'output window, operand 0, single buffered']
    %8 = vsyncpa [#allocation3], 0
    %9 = vsyncpa [#allocation6], 0
    %10 = vsyncpa [#allocation4], 0
    // Predicated region
    $region2: #{tpu_custom_call.1} parent=1 // pred_check
      _
    $region3: #{tpu_custom_call.1} parent=1 // pred_check_branch
      %12 = sbr.rel (0) target = $region5
    $region4: #{tpu_custom_call.1} parent=1 // pred_region
      %s14 = ssub.s32 512, 512
      %15 = vsyncadd [#allocation3], %s14
      %s16 = sshll.u32 [#allocation2], 4
      %s17 = int_to_ptr.vmem [resolvable:$true] %s16
      %22 = dma.hbm_to_vmem [thread:$0]  %s0, 512, %s17, [#allocation3], 128, 128, 8
    $region5: #{tpu_custom_call.1} parent=1 // pred_fallthru
      _
    // Predicated region
    $region6: #{tpu_custom_call.1} parent=1 // pred_check
      _
    $region7: #{tpu_custom_call.1} parent=1 // pred_check_branch
      %24 = sbr.rel (0) target = $region9
    $region8: #{tpu_custom_call.1} parent=1 // pred_region
      %s26 = ssub.s32 2048, 2048
      %27 = vsyncadd [#allocation6], %s26
      %s28 = sshll.u32 [#allocation5], 4
      %s29 = int_to_ptr.vmem [resolvable:$true] %s28
      %34 = dma.hbm_to_vmem [thread:$0]  %s1, 2048, %s29, [#allocation6], 128, 128, 8
    $region9: #{tpu_custom_call.1} parent=1 // pred_fallthru
      _
    // Predicated region
    $region10: #{tpu_custom_call.1} parent=1 // pred_check
      _
    $region11: #{tpu_custom_call.1} parent=1 // pred_check_branch
      %36 = sbr.rel (0) target = $region13
    $region12: #{tpu_custom_call.1} parent=1 // pred_region
      _
    $region13: #{tpu_custom_call.1} parent=1 // pred_fallthru
      _
    // Predicated region
    $region14: #{tpu_custom_call.1} parent=1 // pred_check
      _
    $region15: #{tpu_custom_call.1} parent=1 // pred_check_branch
      %38 = sbr.rel (0) target = $region17
    $region16: #{tpu_custom_call.1} parent=1 // pred_region
      %39 = dma.done [#allocation3], 512
    $region17: #{tpu_custom_call.1} parent=1 // pred_fallthru
      _
    // Predicated region
    $region18: #{tpu_custom_call.1} parent=1 // pred_check
      _
    $region19: #{tpu_custom_call.1} parent=1 // pred_check_branch
      %41 = sbr.rel (0) target = $region21
    $region20: #{tpu_custom_call.1} parent=1 // pred_region
      %42 = dma.done [#allocation6], 2048
    $region21: #{tpu_custom_call.1} parent=1 // pred_fallthru
      _
    %v43 = vld [vmem:[#allocation2] sm:$0xff]
    %v44 = vld [vmem:[#allocation2 + $0x8] sm:$0xff]
    %v45 = vld [vmem:[#allocation2 + $0x10] sm:$0xff]
    %v46 = vld [vmem:[#allocation2 + $0x18] sm:$0xff]
    %v47 = vld [vmem:[#allocation5] sm:$0xff]
    %v48 = vld [vmem:[#allocation5 + $0x8] sm:$0xff]
    %v49 = vld [vmem:[#allocation5 + $0x10] sm:$0xff]
    %v50 = vld [vmem:[#allocation5 + $0x18] sm:$0xff]
    %v51 = vld [vmem:[#allocation5 + $0x20] sm:$0xff]
    %v52 = vld [vmem:[#allocation5 + $0x28] sm:$0xff]
    %v53 = vld [vmem:[#allocation5 + $0x30] sm:$0xff]
    %v54 = vld [vmem:[#allocation5 + $0x38] sm:$0xff]
    %v55 = vld [vmem:[#allocation5 + $0x40] sm:$0xff]
    %v56 = vld [vmem:[#allocation5 + $0x48] sm:$0xff]
    %v57 = vld [vmem:[#allocation5 + $0x50] sm:$0xff]
    %v58 = vld [vmem:[#allocation5 + $0x58] sm:$0xff]
    %v59 = vld [vmem:[#allocation5 + $0x60] sm:$0xff]
    %v60 = vld [vmem:[#allocation5 + $0x68] sm:$0xff]
    %v61 = vld [vmem:[#allocation5 + $0x70] sm:$0xff]
    %v62 = vld [vmem:[#allocation5 + $0x78] sm:$0xff]
    %v63 = vld [vmem:[%s2] sm:$0x1]
    %v65 = vlaneseq
    %v66 = vshrl.u32 %v65, 7
    %v67 = vsub.s32 0, %v66
    %v68 = vrot.slane %v63, %v67
    %70 = vmatprep.subr.mxu0 0.0
    %71 = vmatpush1.msra.mxu0 %v62
    %72 = vmatprep.subr.mxu0 0.0
    %73 = vmatpush1.msra.mxu0 %v61
    %74 = vmatprep.subr.mxu0 0.0
    %75 = vmatpush1.msra.mxu0 %v60
    %76 = vmatprep.subr.mxu0 0.0
    %77 = vmatpush1.msra.mxu0 %v59
    %78 = vmatprep.subr.mxu0 0.0
    %79 = vmatpush1.msra.mxu0 %v58
    %80 = vmatprep.subr.mxu0 0.0
    %81 = vmatpush1.msra.mxu0 %v57
    %82 = vmatprep.subr.mxu0 0.0
    %83 = vmatpush1.msra.mxu0 %v56
    %84 = vmatprep.subr.mxu0 0.0
    %85 = vmatpush1.msra.mxu0 %v55
    %86 = vmatprep.subr.mxu0 0.0
    %87 = vmatpush1.msra.mxu0 %v54
    %88 = vmatprep.subr.mxu0 0.0
    %89 = vmatpush1.msra.mxu0 %v53
    %90 = vmatprep.subr.mxu0 0.0
    %91 = vmatpush1.msra.mxu0 %v52
    %92 = vmatprep.subr.mxu0 0.0
    %93 = vmatpush1.msra.mxu0 %v51
    %94 = vmatprep.subr.mxu0 0.0
    %95 = vmatpush1.msra.mxu0 %v50
    %96 = vmatprep.subr.mxu0 0.0
    %97 = vmatpush1.msra.mxu0 %v49
    %98 = vmatprep.subr.mxu0 0.0
    %99 = vmatpush1.msra.mxu0 %v48
    %100 = vmatprep.subr.mxu0 0.0
    %101 = vmatpush1.msra.mxu0 %v47
    %102 = vmatprep.subr.mxu0 0.0
    %103 = vmatpush2.msra.mxu0 0.0
    %104 = vmatprep.subr.mxu0 0.0
    %105 = vmatpush2.msra.mxu0 0.0
    %106 = vmatprep.subr.mxu0 0.0
    %107 = vmatpush2.msra.mxu0 0.0
    %108 = vmatprep.subr.mxu0 0.0
    %109 = vmatpush2.msra.mxu0 0.0
    %110 = vmatprep.subr.mxu0 0.0
    %111 = vmatpush2.msra.mxu0 0.0
    %112 = vmatprep.subr.mxu0 0.0
    %113 = vmatpush2.msra.mxu0 0.0
    %114 = vmatprep.subr.mxu0 0.0
    %115 = vmatpush2.msra.mxu0 0.0
    %116 = vmatprep.subr.mxu0 0.0
    %117 = vmatpush2.msra.mxu0 0.0
    %118 = vmatprep.subr.mxu0 0.0
    %119 = vmatpush2.msra.mxu0 0.0
    %120 = vmatprep.subr.mxu0 0.0
    %121 = vmatpush2.msra.mxu0 0.0
    %122 = vmatprep.subr.mxu0 0.0
    %123 = vmatpush2.msra.mxu0 0.0
    %124 = vmatprep.subr.mxu0 0.0
    %125 = vmatpush2.msra.mxu0 0.0
    %126 = vmatprep.subr.mxu0 0.0
    %127 = vmatpush2.msra.mxu0 0.0
    %128 = vmatprep.subr.mxu0 0.0
    %129 = vmatpush2.msra.mxu0 0.0
    %130 = vmatprep.subr.mxu0 0.0
    %131 = vmatpush2.msra.mxu0 0.0
    %132 = vmatprep.subr.mxu0 0.0
    %133 = vmatpush2.msra.mxu0 0.0
    %134 = vmatprep.mubr.f32.mxu0 0.0
    %135 = vmatmul.mubr.f32.gmra.mxu0 %v43
    %v136 = vpop.f32.mrf.mxu0
    %v137 = vadd.f32 %v68, %v136
    %v138 = vpop.f32.mrf.mxu0
    %139 = vmatprep.mubr.f32.mxu0 0.0
    %140 = vmatmul.mubr.f32.gmra.mxu0 %v44
    %v141 = vpop.f32.mrf.mxu0
    %v142 = vadd.f32 %v68, %v141
    %v143 = vpop.f32.mrf.mxu0
    %144 = vmatprep.mubr.f32.mxu0 0.0
    %145 = vmatmul.mubr.f32.gmra.mxu0 %v45
    %v146 = vpop.f32.mrf.mxu0
    %v147 = vadd.f32 %v68, %v146
    %v148 = vpop.f32.mrf.mxu0
    %149 = vmatprep.mubr.f32.mxu0 0.0
    %150 = vmatmul.mubr.f32.gmra.mxu0 %v46
    %v151 = vpop.f32.mrf.mxu0
    %v152 = vadd.f32 %v68, %v151
    %v153 = vpop.f32.mrf.mxu0
    %154 = vdwg.mxu0
    %155 = vst [vmem:[#allocation7] sm:$0xff] %v137
    %156 = vst [vmem:[#allocation7 + $0x8] sm:$0xff] %v142
    %157 = vst [vmem:[#allocation7 + $0x10] sm:$0xff] %v147
    %158 = vst [vmem:[#allocation7 + $0x18] sm:$0xff] %v152
    // Predicated region
    $region22: #{tpu_custom_call.1} parent=1 // pred_check
      _
    $region23: #{tpu_custom_call.1} parent=1 // pred_check_branch
      %160 = sbr.rel (0) target = $region25
    $region24: #{tpu_custom_call.1} parent=1 // pred_region
      %s162 = ssub.s32 512, 512
      %163 = vsyncadd [#allocation4], %s162
      %s164 = sshll.u32 [#allocation7], 4
      %s165 = int_to_ptr.vmem [resolvable:$true] %s164
      %170 = dma.vmem_to_hbm [thread:$0]  %s165, 512, %s3, [#allocation4], 128, 128, 8
    $region25: #{tpu_custom_call.1} parent=1 // pred_fallthru
      _
    // Predicated region
    $region26: #{tpu_custom_call.1} parent=1 // pred_check
      _
    $region27: #{tpu_custom_call.1} parent=1 // pred_check_branch
      %172 = sbr.rel (0) target = $region29
    $region28: #{tpu_custom_call.1} parent=1 // pred_region
      %173 = dma.done [#allocation4], 512
    $region29: #{tpu_custom_call.1} parent=1 // pred_fallthru
      _
    %174 = vsyncpa [#allocation3], 1
    %175 = vsyncpa [#allocation6], 1
    %176 = vsyncpa [#allocation4], 1

</llo_original>
